<compile_context>
chip_gen: v7x
topology: tpu7x:2x2x1
jax: 0.10.0
libtpu: 0.0.40
codegen_flags: <defaults>
</compile_context>

<pallas_src>
import functools

import jax
import jax.numpy as jnp
from jax.experimental import pallas as pl
from jax.experimental.pallas import tpu as pltpu

MARGIN = 0.5
LOSS_TRADE = 0.5
EPS = 1e-8


def _round_up(x, m):
    return ((x + m - 1) // m) * m


def _make_kernel(n_actual, tn):
    inv_n = 1.0 / float(n_actual)

    def kernel(pre_ref, label_ref, anc_ref, cand_ref, out_ref,
               contra_acc, ce_acc):
        pid = pl.program_id(0)

        @pl.when(pid == 0)
        def _init():
            contra_acc[...] = jnp.zeros_like(contra_acc)
            ce_acc[...] = jnp.zeros_like(ce_acc)

        pre = pre_ref[...].astype(jnp.float32)     # (TN, C)
        lab = label_ref[...].astype(jnp.int32)     # (TN, 1)
        a = anc_ref[...].astype(jnp.float32)       # (TN, D)
        b = cand_ref[...].astype(jnp.float32)      # (TN, D)

        # Valid-row mask for the zero-padded tail of the last tile.
        row = jax.lax.broadcasted_iota(jnp.int32, (tn, 1), 0) + pid * tn
        valid = (row < n_actual).astype(jnp.float32)             # (TN, 1)

        # --- cosine distance (torch F.cosine_similarity, dim=1, eps=1e-8) ---
        dot = jnp.sum(a * b, axis=-1, keepdims=True)              # (TN, 1)
        ssa = jnp.sum(a * a, axis=-1, keepdims=True)
        ssb = jnp.sum(b * b, axis=-1, keepdims=True)
        # rsqrt(max(ss, eps^2)) == 1 / max(sqrt(ss), eps)   (sqrt monotonic)
        cos = (dot
               * jax.lax.rsqrt(jnp.maximum(ssa, EPS * EPS))
               * jax.lax.rsqrt(jnp.maximum(ssb, EPS * EPS)))
        dist = 1.0 - cos                                          # (TN, 1)

        # --- contrastive term (label reused exactly as in the PyTorch module) ---
        labf = lab.astype(jnp.float32)
        hinge = jnp.maximum(MARGIN - dist, 0.0)
        contra = 0.5 * ((1.0 - labf) * dist * dist + labf * hinge * hinge)
        contra_acc[...] += jnp.sum(contra * valid, keepdims=True)

        # --- cross entropy (sum of per-row NLL; mean uses global N later) ---
        m = jnp.max(pre, axis=-1, keepdims=True)
        z = pre - m
        lse = jnp.log(jnp.sum(jnp.exp(z), axis=-1, keepdims=True))
        col = jax.lax.broadcasted_iota(jnp.int32, pre.shape, 1)   # (TN, C)
        onehot = (col == lab).astype(jnp.float32)
        z_lab = jnp.sum(onehot * z, axis=-1, keepdims=True)       # (TN, 1)
        nll = lse - z_lab
        ce_acc[...] += jnp.sum(nll * valid, keepdims=True)

        @pl.when(pid == pl.num_programs(0) - 1)
        def _finalize():
            out_ref[...] = (LOSS_TRADE * contra_acc[...] + ce_acc[...]) * inv_n

    return kernel


@functools.partial(jax.jit, static_argnames=("block_rows",))
def crossentropy_contrastive_loss(pre, label, rep_anchor, rep_candidate,
                                  *, block_rows=256):
    """pre: (N,C), label: (N,), rep_*: (N,D) -> scalar f32 loss."""
    n, c = pre.shape
    d = rep_anchor.shape[-1]

    tn = min(_round_up(block_rows, 8), _round_up(n, 8))
    n_pad = _round_up(n, tn)

    label2d = label.astype(jnp.int32).reshape(-1, 1)
    if n_pad != n:
        p = n_pad - n
        pre = jnp.pad(pre, ((0, p), (0, 0)))
        label2d = jnp.pad(label2d, ((0, p), (0, 0)))
        rep_anchor = jnp.pad(rep_anchor, ((0, p), (0, 0)))
        rep_candidate = jnp.pad(rep_candidate, ((0, p), (0, 0)))

    kernel = _make_kernel(n, tn)

    out = pl.pallas_call(
        kernel,
        out_shape=jax.ShapeDtypeStruct((1, 1), jnp.float32),
        grid_spec=pltpu.PrefetchScalarGridSpec(
            num_scalar_prefetch=0,
            grid=(n_pad // tn,),
            in_specs=[
                pl.BlockSpec((tn, c), lambda i: (i, 0)),
                pl.BlockSpec((tn, 1), lambda i: (i, 0)),
                pl.BlockSpec((tn, d), lambda i: (i, 0)),
                pl.BlockSpec((tn, d), lambda i: (i, 0)),
            ],
            out_specs=pl.BlockSpec((1, 1), lambda i: (0, 0)),
            scratch_shapes=[pltpu.VMEM((1, 1), jnp.float32),
                            pltpu.VMEM((1, 1), jnp.float32)],
        ),
        compiler_params=pltpu.CompilerParams(
            dimension_semantics=("arbitrary",),
            vmem_limit_bytes=32 * 1024 * 1024,
        ),
    )(pre, label2d, rep_anchor, rep_candidate)
    return out[0, 0]


def _reference(pre, label, rep_anchor, rep_candidate):
    # pure-JAX reference mirroring the PyTorch forward
    a = rep_anchor.astype(jnp.float32)
    b = rep_candidate.astype(jnp.float32)
    dot = jnp.sum(a * b, axis=-1)
    na = jnp.linalg.norm(a, axis=-1)
    nb = jnp.linalg.norm(b, axis=-1)
    cos = dot / (jnp.maximum(na, EPS) * jnp.maximum(nb, EPS))
    d = 1.0 - cos
    labf = label.astype(jnp.float32)
    loss_contra = jnp.mean(
        0.5 * ((1.0 - labf) * d**2 + labf * jnp.maximum(MARGIN - d, 0.0) ** 2))
    logp = jax.nn.log_softmax(pre.astype(jnp.float32), axis=-1)
    ce = -jnp.mean(jnp.take_along_axis(
        logp, label[:, None].astype(jnp.int32), axis=-1)[:, 0])
    return LOSS_TRADE * loss_contra + ce


if __name__ == "__main__":
    key = jax.random.PRNGKey(0)

    # --- case 1: small, evenly tiled ---
    N, C, D = 8, 4, 32
    k1, k2, k3, k4 = jax.random.split(key, 4)
    pre = jax.random.normal(k1, (N, C), dtype=jnp.float32)
    label = jax.random.randint(k2, (N,), 0, C, dtype=jnp.int32)
    rep_anchor = jax.random.normal(k3, (N, D), dtype=jnp.float32)
    rep_candidate = jax.random.normal(k4, (N, D), dtype=jnp.float32)

    loss = crossentropy_contrastive_loss(pre, label, rep_anchor, rep_candidate)
    loss = jax.block_until_ready(loss)
    ref = _reference(pre, label, rep_anchor, rep_candidate)
    assert jnp.allclose(loss, ref, rtol=1e-5, atol=1e-5), (loss, ref)

    # --- case 2: multi-tile grid + padded tail (exercises accumulator/mask) ---
    N2, C2, D2 = 20, 4, 32
    k5, k6, k7, k8 = jax.random.split(jax.random.PRNGKey(1), 4)
    pre2 = jax.random.normal(k5, (N2, C2), dtype=jnp.float32)
    label2 = jax.random.randint(k6, (N2,), 0, C2, dtype=jnp.int32)
    anc2 = jax.random.normal(k7, (N2, D2), dtype=jnp.float32)
    cand2 = jax.random.normal(k8, (N2, D2), dtype=jnp.float32)

    loss2 = crossentropy_contrastive_loss(pre2, label2, anc2, cand2,
                                          block_rows=8)
    loss2 = jax.block_until_ready(loss2)
    ref2 = _reference(pre2, label2, anc2, cand2)
    assert jnp.allclose(loss2, ref2, rtol=1e-5, atol=1e-5), (loss2, ref2)

    print("KERNEL_OK")
</pallas_src>

<mosaic_0001>
module attributes {stable_mosaic.version = 11 : i64} {
  func.func @kernel(%arg0: i32, %arg1: memref<8x4xf32, #tpu.memory_space<vmem>>, %arg2: memref<8x1xi32, #tpu.memory_space<vmem>>, %arg3: memref<8x32xf32, #tpu.memory_space<vmem>>, %arg4: memref<8x32xf32, #tpu.memory_space<vmem>>, %arg5: memref<1x1xf32, #tpu.memory_space<vmem>>, %arg6: memref<1x1xf32, #tpu.memory_space<vmem>>, %arg7: memref<1x1xf32, #tpu.memory_space<vmem>>) attributes {dimension_semantics = [#tpu.dimension_semantics<arbitrary>], iteration_bounds = array<i64: 1>, scalar_prefetch = 0 : i64, scratch_operands = 2 : i64, tpu.core_type = #tpu.core_type<tc>, window_params = [{transform_indices = @transform_0, window_bounds = array<i64: 8, 4>}, {transform_indices = @transform_1, window_bounds = array<i64: 8, 1>}, {transform_indices = @transform_2, window_bounds = array<i64: 8, 32>}, {transform_indices = @transform_3, window_bounds = array<i64: 8, 32>}, {pipeline_mode = #tpu.pipeline_mode<synchronous>, transform_indices = @transform_4, window_bounds = array<i64: 1, 1>}]} {
    %c0_i32 = arith.constant 0 : i32
    %0 = arith.cmpi eq, %arg0, %c0_i32 : i32
    %1 = arith.extui %0 : i1 to i32
    %c0_i32_0 = arith.constant 0 : i32
    %2 = arith.cmpi ne, %1, %c0_i32_0 : i32
    scf.if %2 {
      %cst_33 = arith.constant 0.000000e+00 : f32
      %86 = vector.broadcast %cst_33 : f32 to vector<1x1xf32>
      %c0_34 = arith.constant 0 : index
      %c0_35 = arith.constant 0 : index
      %87 = vector.load %arg6[%c0_34, %c0_35] : memref<1x1xf32, #tpu.memory_space<vmem>>, vector<1x1xf32>
      tpu.vector_store %arg6[%c0_34, %c0_35], %86 {strides = array<i32>} : memref<1x1xf32, #tpu.memory_space<vmem>>, vector<1x1xf32>,
      %cst_36 = arith.constant 0.000000e+00 : f32
      %88 = vector.broadcast %cst_36 : f32 to vector<1x1xf32>
      %c0_37 = arith.constant 0 : index
      %c0_38 = arith.constant 0 : index
      %89 = vector.load %arg7[%c0_37, %c0_38] : memref<1x1xf32, #tpu.memory_space<vmem>>, vector<1x1xf32>
      tpu.vector_store %arg7[%c0_37, %c0_38], %88 {strides = array<i32>} : memref<1x1xf32, #tpu.memory_space<vmem>>, vector<1x1xf32>,
    } else {
    }
    %c0 = arith.constant 0 : index
    %c0_1 = arith.constant 0 : index
    %3 = vector.load %arg1[%c0, %c0_1] : memref<8x4xf32, #tpu.memory_space<vmem>>, vector<8x4xf32>
    %c0_2 = arith.constant 0 : index
    %c0_3 = arith.constant 0 : index
    %4 = vector.load %arg2[%c0_2, %c0_3] : memref<8x1xi32, #tpu.memory_space<vmem>>, vector<8x1xi32>
    %c0_4 = arith.constant 0 : index
    %c0_5 = arith.constant 0 : index
    %5 = vector.load %arg3[%c0_4, %c0_5] : memref<8x32xf32, #tpu.memory_space<vmem>>, vector<8x32xf32>
    %c0_6 = arith.constant 0 : index
    %c0_7 = arith.constant 0 : index
    %6 = vector.load %arg4[%c0_6, %c0_7] : memref<8x32xf32, #tpu.memory_space<vmem>>, vector<8x32xf32>
    %7 = tpu.iota {dimensions = array<i32: 0>} : vector<8x1xi32>
    %c8_i32 = arith.constant 8 : i32
    %8 = arith.muli %arg0, %c8_i32 : i32
    %9 = vector.broadcast %8 : i32 to vector<8x1xi32>
    %10 = arith.addi %7, %9 : vector<8x1xi32>
    %c8_i32_8 = arith.constant 8 : i32
    %11 = vector.broadcast %c8_i32_8 : i32 to vector<8x1xi32>
    %12 = arith.cmpi slt, %10, %11 : vector<8x1xi32>
    %13 = arith.extui %12 : vector<8x1xi1> to vector<8x1xi32>
    %14 = arith.sitofp %13 : vector<8x1xi32> to vector<8x1xf32>
    %15 = arith.mulf %5, %6 : vector<8x32xf32>
    %cst = arith.constant dense<0.000000e+00> : vector<8xf32>
    %16 = vector.multi_reduction <add>, %15, %cst [1] : vector<8x32xf32> to vector<8xf32>
    %17 = vector.shape_cast %16 : vector<8xf32> to vector<8x1xf32>
    %18 = arith.mulf %5, %5 : vector<8x32xf32>
    %cst_9 = arith.constant dense<0.000000e+00> : vector<8xf32>
    %19 = vector.multi_reduction <add>, %18, %cst_9 [1] : vector<8x32xf32> to vector<8xf32>
    %20 = vector.shape_cast %19 : vector<8xf32> to vector<8x1xf32>
    %21 = arith.mulf %6, %6 : vector<8x32xf32>
    %cst_10 = arith.constant dense<0.000000e+00> : vector<8xf32>
    %22 = vector.multi_reduction <add>, %21, %cst_10 [1] : vector<8x32xf32> to vector<8xf32>
    %23 = vector.shape_cast %22 : vector<8xf32> to vector<8x1xf32>
    %cst_11 = arith.constant 1.000000e-16 : f32
    %24 = vector.broadcast %cst_11 : f32 to vector<8x1xf32>
    %25 = arith.maximumf %20, %24 : vector<8x1xf32>
    %26 = math.rsqrt %25 : vector<8x1xf32>
    %27 = arith.mulf %17, %26 : vector<8x1xf32>
    %cst_12 = arith.constant 1.000000e-16 : f32
    %28 = vector.broadcast %cst_12 : f32 to vector<8x1xf32>
    %29 = arith.maximumf %23, %28 : vector<8x1xf32>
    %30 = math.rsqrt %29 : vector<8x1xf32>
    %31 = arith.mulf %27, %30 : vector<8x1xf32>
    %cst_13 = arith.constant 1.000000e+00 : f32
    %32 = vector.broadcast %cst_13 : f32 to vector<8x1xf32>
    %33 = arith.subf %32, %31 : vector<8x1xf32>
    %34 = arith.sitofp %4 : vector<8x1xi32> to vector<8x1xf32>
    %cst_14 = arith.constant 5.000000e-01 : f32
    %35 = vector.broadcast %cst_14 : f32 to vector<8x1xf32>
    %36 = arith.subf %35, %33 : vector<8x1xf32>
    %cst_15 = arith.constant 0.000000e+00 : f32
    %37 = vector.broadcast %cst_15 : f32 to vector<8x1xf32>
    %38 = arith.maximumf %36, %37 : vector<8x1xf32>
    %cst_16 = arith.constant 1.000000e+00 : f32
    %39 = vector.broadcast %cst_16 : f32 to vector<8x1xf32>
    %40 = arith.subf %39, %34 : vector<8x1xf32>
    %41 = arith.mulf %40, %33 : vector<8x1xf32>
    %42 = arith.mulf %41, %33 : vector<8x1xf32>
    %43 = arith.mulf %34, %38 : vector<8x1xf32>
    %44 = arith.mulf %43, %38 : vector<8x1xf32>
    %45 = arith.addf %42, %44 : vector<8x1xf32>
    %cst_17 = arith.constant 5.000000e-01 : f32
    %46 = vector.broadcast %cst_17 : f32 to vector<8x1xf32>
    %47 = arith.mulf %46, %45 : vector<8x1xf32>
    %c0_18 = arith.constant 0 : index
    %c0_19 = arith.constant 0 : index
    %48 = vector.load %arg6[%c0_18, %c0_19] : memref<1x1xf32, #tpu.memory_space<vmem>>, vector<1x1xf32>
    %49 = arith.mulf %47, %14 : vector<8x1xf32>
    %50 = vector.shape_cast %49 : vector<8x1xf32> to vector<1x8x1xf32>
    %cst_20 = arith.constant dense<0.000000e+00> : vector<1xf32>
    %51 = vector.multi_reduction <add>, %50, %cst_20 [1, 2] : vector<1x8x1xf32> to vector<1xf32>
    %52 = vector.shape_cast %51 : vector<1xf32> to vector<1x1x1xf32>
    %53 = vector.extract %52[0, 0, 0] : f32 from vector<1x1x1xf32>
    %54 = vector.broadcast %53 : f32 to vector<1x1xf32>
    %55 = arith.addf %48, %54 : vector<1x1xf32>
    %c0_21 = arith.constant 0 : index
    %c0_22 = arith.constant 0 : index
    %56 = vector.load %arg6[%c0_21, %c0_22] : memref<1x1xf32, #tpu.memory_space<vmem>>, vector<1x1xf32>
    tpu.vector_store %arg6[%c0_21, %c0_22], %55 {strides = array<i32>} : memref<1x1xf32, #tpu.memory_space<vmem>>, vector<1x1xf32>,
    %cst_23 = arith.constant dense<0xFF800000> : vector<8xf32>
    %57 = vector.multi_reduction <maximumf>, %3, %cst_23 [1] : vector<8x4xf32> to vector<8xf32>
    %58 = vector.shape_cast %57 : vector<8xf32> to vector<8x1xf32>
    %59 = vector.broadcast %58 : vector<8x1xf32> to vector<8x4xf32>
    %60 = arith.subf %3, %59 : vector<8x4xf32>
    %61 = math.exp %60 : vector<8x4xf32>
    %cst_24 = arith.constant dense<0.000000e+00> : vector<8xf32>
    %62 = vector.multi_reduction <add>, %61, %cst_24 [1] : vector<8x4xf32> to vector<8xf32>
    %63 = vector.shape_cast %62 : vector<8xf32> to vector<8x1xf32>
    %64 = math.log %63 : vector<8x1xf32>
    %65 = tpu.iota {dimensions = array<i32: 1>} : vector<8x4xi32>
    %66 = vector.broadcast %4 : vector<8x1xi32> to vector<8x4xi32>
    %67 = arith.cmpi eq, %65, %66 : vector<8x4xi32>
    %68 = arith.extui %67 : vector<8x4xi1> to vector<8x4xi32>
    %69 = arith.sitofp %68 : vector<8x4xi32> to vector<8x4xf32>
    %70 = arith.mulf %69, %60 : vector<8x4xf32>
    %cst_25 = arith.constant dense<0.000000e+00> : vector<8xf32>
    %71 = vector.multi_reduction <add>, %70, %cst_25 [1] : vector<8x4xf32> to vector<8xf32>
    %72 = vector.shape_cast %71 : vector<8xf32> to vector<8x1xf32>
    %73 = arith.subf %64, %72 : vector<8x1xf32>
    %c0_26 = arith.constant 0 : index
    %c0_27 = arith.constant 0 : index
    %74 = vector.load %arg7[%c0_26, %c0_27] : memref<1x1xf32, #tpu.memory_space<vmem>>, vector<1x1xf32>
    %75 = arith.mulf %73, %14 : vector<8x1xf32>
    %76 = vector.shape_cast %75 : vector<8x1xf32> to vector<1x8x1xf32>
    %cst_28 = arith.constant dense<0.000000e+00> : vector<1xf32>
    %77 = vector.multi_reduction <add>, %76, %cst_28 [1, 2] : vector<1x8x1xf32> to vector<1xf32>
    %78 = vector.shape_cast %77 : vector<1xf32> to vector<1x1x1xf32>
    %79 = vector.extract %78[0, 0, 0] : f32 from vector<1x1x1xf32>
    %80 = vector.broadcast %79 : f32 to vector<1x1xf32>
    %81 = arith.addf %74, %80 : vector<1x1xf32>
    %c0_29 = arith.constant 0 : index
    %c0_30 = arith.constant 0 : index
    %82 = vector.load %arg7[%c0_29, %c0_30] : memref<1x1xf32, #tpu.memory_space<vmem>>, vector<1x1xf32>
    tpu.vector_store %arg7[%c0_29, %c0_30], %81 {strides = array<i32>} : memref<1x1xf32, #tpu.memory_space<vmem>>, vector<1x1xf32>,
    %c0_i32_31 = arith.constant 0 : i32
    %83 = arith.cmpi eq, %arg0, %c0_i32_31 : i32
    %84 = arith.extui %83 : i1 to i32
    %c0_i32_32 = arith.constant 0 : i32
    %85 = arith.cmpi ne, %84, %c0_i32_32 : i32
    scf.if %85 {
      %c0_33 = arith.constant 0 : index
      %c0_34 = arith.constant 0 : index
      %86 = vector.load %arg6[%c0_33, %c0_34] : memref<1x1xf32, #tpu.memory_space<vmem>>, vector<1x1xf32>
      %cst_35 = arith.constant 5.000000e-01 : f32
      %87 = vector.broadcast %cst_35 : f32 to vector<1x1xf32>
      %88 = arith.mulf %87, %86 : vector<1x1xf32>
      %c0_36 = arith.constant 0 : index
      %c0_37 = arith.constant 0 : index
      %89 = vector.load %arg7[%c0_36, %c0_37] : memref<1x1xf32, #tpu.memory_space<vmem>>, vector<1x1xf32>
      %90 = arith.addf %88, %89 : vector<1x1xf32>
      %cst_38 = arith.constant 1.250000e-01 : f32
      %91 = vector.broadcast %cst_38 : f32 to vector<1x1xf32>
      %92 = arith.mulf %90, %91 : vector<1x1xf32>
      %c0_39 = arith.constant 0 : index
      %c0_40 = arith.constant 0 : index
      %93 = vector.load %arg5[%c0_39, %c0_40] : memref<1x1xf32, #tpu.memory_space<vmem>>, vector<1x1xf32>
      tpu.vector_store %arg5[%c0_39, %c0_40], %92 {strides = array<i32>} : memref<1x1xf32, #tpu.memory_space<vmem>>, vector<1x1xf32>,
    } else {
    }
    return
  }
  func.func @transform_0(%arg0: i32) -> (i32, i32) {
    %c0_i32 = arith.constant 0 : i32
    %c0_i32_0 = arith.constant 0 : i32
    return %arg0, %c0_i32 : i32, i32
  }
  func.func @transform_1(%arg0: i32) -> (i32, i32) {
    %c0_i32 = arith.constant 0 : i32
    %c0_i32_0 = arith.constant 0 : i32
    return %arg0, %c0_i32 : i32, i32
  }
  func.func @transform_2(%arg0: i32) -> (i32, i32) {
    %c0_i32 = arith.constant 0 : i32
    %c0_i32_0 = arith.constant 0 : i32
    return %arg0, %c0_i32 : i32, i32
  }
  func.func @transform_3(%arg0: i32) -> (i32, i32) {
    %c0_i32 = arith.constant 0 : i32
    %c0_i32_0 = arith.constant 0 : i32
    return %arg0, %c0_i32 : i32, i32
  }
  func.func @transform_4(%arg0: i32) -> (i32, i32) {
    %c0_i32 = arith.constant 0 : i32
    %c0_i32_0 = arith.constant 0 : i32
    %c0_i32_1 = arith.constant 0 : i32
    return %c0_i32, %c0_i32_0 : i32, i32
  }
}

</mosaic_0001>

<llo_original>
// kernel: crossentropy_contrastive_loss.1
$region0: #{crossentropy_contrastive_loss.1}
  #allocation0 [shape = 'u32[]', space=smem, size = 0x4, offset = 0x4, fixed_abs, tag = 'smem constant byte address 0x4 - core index']
  #allocation1 [shape = 'u32[144,128]{1,0:T(1,128)}', space=vmem, size = 0x12000, scoped, tag = 'internal scratch']
  #allocation2 [shape = 'f32[1,1]{1,0:T(1,128)}', space=vmem, size = 0x200, scoped, tag = 'scratch operand']
  #allocation3 [shape = 'f32[1,1]{1,0:T(1,128)}', space=vmem, size = 0x200, scoped, tag = 'scratch operand']
  %s0 = inlined_call_operand.vmem [shape: f32[8,4], index: 0, kind: input, shape index: {}]
  %s1 = inlined_call_operand.vmem [shape: s32[8,1], index: 1, kind: input, shape index: {}]
  %s2 = inlined_call_operand.vmem [shape: f32[8,32], index: 2, kind: input, shape index: {}]
  %s3 = inlined_call_operand.vmem [shape: f32[8,32], index: 3, kind: input, shape index: {}]
  %s4 = inlined_call_operand.hbm [shape: f32[1,1], index: 4, kind: output, shape index: {}]
  %s5 = sld [smem:[#allocation0]]
  $region34: #{crossentropy_contrastive_loss.1} parent=0
    _
  %s7 = ssub.s32 1, %s5
  %s8 = scalar_select 0, %s7, %s5
  $region1: #{crossentropy_contrastive_loss.1} parent=0
    #allocation4 [shape = 'u8[512]{0}', space=vmem, size = 0x400, scoped, tag = 'output window, operand 0, single buffered']
    #allocation5 [shape = 's32[1]{0}', space=sflag, size = 0x4, scoped, tag = 'scoped memory for crossentropy_contrastive_loss.1']
    %9 = vsyncpa [#allocation5], 0
    // Predicated region
    $region2: #{crossentropy_contrastive_loss.1} parent=1 // pred_check
      _
    $region3: #{crossentropy_contrastive_loss.1} parent=1 // pred_check_branch
      %11 = sbr.rel (0) target = $region5
    $region4: #{crossentropy_contrastive_loss.1} parent=1 // pred_region
      _
    $region5: #{crossentropy_contrastive_loss.1} parent=1 // pred_fallthru
      _
    // Predicated region
    $region6: #{crossentropy_contrastive_loss.1} parent=1 // pred_check
      _
    $region7: #{crossentropy_contrastive_loss.1} parent=1 // pred_check_branch
      %13 = sbr.rel (0) target = $region9
    $region8: #{crossentropy_contrastive_loss.1} parent=1 // pred_region
      _
    $region9: #{crossentropy_contrastive_loss.1} parent=1 // pred_fallthru
      _
    // Predicated region
    $region10: #{crossentropy_contrastive_loss.1} parent=1 // pred_check
      _
    $region11: #{crossentropy_contrastive_loss.1} parent=1 // pred_check_branch
      %15 = sbr.rel (0) target = $region13
    $region12: #{crossentropy_contrastive_loss.1} parent=1 // pred_region
      _
    $region13: #{crossentropy_contrastive_loss.1} parent=1 // pred_fallthru
      _
    // Predicated region
    $region14: #{crossentropy_contrastive_loss.1} parent=1 // pred_check
      _
    $region15: #{crossentropy_contrastive_loss.1} parent=1 // pred_check_branch
      %17 = sbr.rel (0) target = $region17
    $region16: #{crossentropy_contrastive_loss.1} parent=1 // pred_region
      _
    $region17: #{crossentropy_contrastive_loss.1} parent=1 // pred_fallthru
      _
    %p18 = scmp.eq.s32.totalorder 0, 0
    // Predicated region
    $region18: #{crossentropy_contrastive_loss.1} parent=1 // pred_check
      %p19 = pneg %p18
    $region19: #{crossentropy_contrastive_loss.1} parent=1 // pred_check_branch
      %21 = sbr.rel (%p19) target = $region21
    $region20: #{crossentropy_contrastive_loss.1} parent=1 // pred_region
      %vm22 = vcmask 0
      %23 = vst.msk [vmem:[#allocation2] sm:$0x1] %vm22, 0.0
      %24 = vst.msk [vmem:[#allocation3] sm:$0x1] %vm22, 0.0
    $region21: #{crossentropy_contrastive_loss.1} parent=1 // pred_fallthru
      _
    %v25 = vld [vmem:[%s0] sm:$0xff]
    %v26 = vld [vmem:[%s1] sm:$0xff]
    %v27 = vld [vmem:[%s2] sm:$0xff]
    %v28 = vld [vmem:[%s3] sm:$0xff]
    %v29 = vlaneseq
    %v30 = vshrl.u32 %v29, 7
    %s31 = smul.u32 0, 8
    %v32 = vstv %s31
    %v33 = vadd.s32 %v30, %v32
    %vm34 = vcmp.lt.s32.totalorder %v33, 8
    %v35 = vsel %vm34, 1, 0
    %v36 = vcvt.s32.f32 %v35
    %v37 = vmul.f32 %v27, %v28
    %vm38 = vcmask 261120
    %v39 = vsel %vm38, %v37, 0.0
    %40 = vadd.xlane.f32.xlu0 %v39
    %v41 = vpop.xlane.xlu0 %40
    %v42 = vmul.f32 %v27, %v27
    %v43 = vsel %vm38, %v42, 0.0
    %44 = vadd.xlane.f32.xlu0 %v43
    %v45 = vpop.xlane.xlu0 %44
    %v46 = vmul.f32 %v28, %v28
    %v47 = vsel %vm38, %v46, 0.0
    %48 = vadd.xlane.f32.xlu0 %v47
    %v49 = vpop.xlane.xlu0 %48
    %v50 = vmax.f32 %v45, 1e-16
    %v51 = vrsqrt.pop %v50
    %v52 = vmul.f32 %v41, %v51
    %v53 = vmax.f32 %v49, 1e-16
    %v54 = vrsqrt.pop %v53
    %v55 = vmul.f32 %v52, %v54
    %v56 = vsub.f32 1.0, %v55
    %v57 = vcvt.s32.f32 %v26
    %v58 = vsub.f32 0.5, %v56
    %v59 = vmax.f32 %v58, 0.0
    %v60 = vsub.f32 1.0, %v57
    %v61 = vmul.f32 %v60, %v56
    %v62 = vmul.f32 %v61, %v56
    %v63 = vmul.f32 %v57, %v59
    %v64 = vmul.f32 %v63, %v59
    %v65 = vadd.f32 %v62, %v64
    %v66 = vmul.f32 %v65, 0.5
    %v67 = vld [vmem:[#allocation2] sm:$0x1]
    %v68 = vmul.f32 %v66, %v36
    %vm69 = vcmask 7168
    %v70 = vsel %vm69, %v68, 0.0
    %71 = vadd.xlane.f32.xlu0 %v70
    %v72 = vpop.xlane.xlu0 %71
    %v73 = vrot.slane %v72, 4
    %v74 = vadd.f32 %v72, %v73
    %v75 = vrot.slane %v74, 2
    %v76 = vadd.f32 %v74, %v75
    %v77 = vrot.slane %v76, 1
    %v78 = vadd.f32 %v76, %v77
    %s79 = vtos %v78
    %v80 = vstv %s79
    %v81 = vadd.f32 %v67, %v80
    %vm82 = vcmask 0
    %83 = vst.msk [vmem:[#allocation2] sm:$0x1] %vm82, %v81
    %vm84 = vcmask 31744
    %v85 = vsel %vm84, %v25, -inf
    %86 = vmax.xlane.f32.xlu0 %v85
    %v87 = vpop.xlane.xlu0 %86
    %v88 = vsub.f32 %v25, %v87
    %v89 = vmul.f32 %v88, 1.442695
    %v90 = vpow.pop %v89
    %v91 = vsel %vm84, %v90, 0.0
    %92 = vadd.xlane.f32.xlu0 %v91
    %v93 = vpop.xlane.xlu0 %92
    %v94 = vlog2.pop %v93
    %v95 = vmul.f32 %v94, 0.6931472
    %v96 = vlaneseq
    %v97 = vand.u32 %v96, 127
    %98 = vset.pattern.permute.xlu0 0
    %99 = vperm.xlu0 %98, %v26
    %v100 = vpop.permute.xlu0 %99
    %vm101 = vcmp.eq.s32.totalorder %v97, %v100
    %v102 = vsel %vm101, 1, 0
    %v103 = vcvt.s32.f32 %v102
    %v104 = vmul.f32 %v103, %v88
    %v105 = vsel %vm84, %v104, 0.0
    %106 = vadd.xlane.f32.xlu0 %v105
    %v107 = vpop.xlane.xlu0 %106
    %v108 = vsub.f32 %v95, %v107
    %v109 = vld [vmem:[#allocation3] sm:$0x1]
    %v110 = vmul.f32 %v108, %v36
    %v111 = vsel %vm69, %v110, 0.0
    %112 = vadd.xlane.f32.xlu0 %v111
    %v113 = vpop.xlane.xlu0 %112
    %v114 = vrot.slane %v113, 4
    %v115 = vadd.f32 %v113, %v114
    %v116 = vrot.slane %v115, 2
    %v117 = vadd.f32 %v115, %v116
    %v118 = vrot.slane %v117, 1
    %v119 = vadd.f32 %v117, %v118
    %s120 = vtos %v119
    %v121 = vstv %s120
    %v122 = vadd.f32 %v109, %v121
    %123 = vst.msk [vmem:[#allocation3] sm:$0x1] %vm82, %v122
    // Predicated region
    $region22: #{crossentropy_contrastive_loss.1} parent=1 // pred_check
      %p124 = pneg %p18
    $region23: #{crossentropy_contrastive_loss.1} parent=1 // pred_check_branch
      %126 = sbr.rel (%p124) target = $region25
    $region24: #{crossentropy_contrastive_loss.1} parent=1 // pred_region
      %v127 = vld [vmem:[#allocation2] sm:$0x1]
      %v128 = vmul.f32 %v127, 0.5
      %v129 = vld [vmem:[#allocation3] sm:$0x1]
      %v130 = vadd.f32 %v128, %v129
      %v131 = vmul.f32 %v130, 0.125
      %132 = vst.msk [vmem:[#allocation4] sm:$0x1] %vm82, %v131
    $region25: #{crossentropy_contrastive_loss.1} parent=1 // pred_fallthru
      _
    // Predicated region
    $region26: #{crossentropy_contrastive_loss.1} parent=1 // pred_check
      _
    $region27: #{crossentropy_contrastive_loss.1} parent=1 // pred_check_branch
      %134 = sbr.rel (0) target = $region29
    $region28: #{crossentropy_contrastive_loss.1} parent=1 // pred_region
      %s136 = ssub.s32 16, 16
      %137 = vsyncadd [#allocation5], %s136
      %s139 = sshll.u32 [#allocation4], 4
      %s140 = int_to_ptr.vmem [resolvable:$true] %s139
      %142 = dma.vmem_to_hbm [thread:$0]  %s140, 16, %s4, [#allocation5]
    $region29: #{crossentropy_contrastive_loss.1} parent=1 // pred_fallthru
      _
    // Predicated region
    $region30: #{crossentropy_contrastive_loss.1} parent=1 // pred_check
      _
    $region31: #{crossentropy_contrastive_loss.1} parent=1 // pred_check_branch
      %144 = sbr.rel (0) target = $region33
    $region32: #{crossentropy_contrastive_loss.1} parent=1 // pred_region
      %145 = dma.done [#allocation5], 16
    $region33: #{crossentropy_contrastive_loss.1} parent=1 // pred_fallthru
      _
    %146 = vsyncpa [#allocation5], 1

</llo_original>
